<compile_context>
chip_gen: v7x
topology: tpu7x:2x2x1
jax: 0.10.0
libtpu: 0.0.40
codegen_flags: <defaults>
</compile_context>

<pallas_src>
import functools

import jax
import jax.numpy as jnp
from jax.experimental import pallas as pl
from jax.experimental.pallas import tpu as pltpu


def _conv_stats_kernel(x_ref, w_ref, mask_ref, y_ref, stats_ref, *, K, W, HW):
    """Pass 1: valid conv (as 9 shifted-window matmuls) + per-image BN partial stats.

    x_ref    : (1, Cin, Lpad)    bf16  flattened (H*W) spatial axis + zero tail
    w_ref    : (K*K, Cout, Cin)  bf16  per-tap weight matrices
    mask_ref : (1, HW)           f32   1.0 on valid output pixels (y < Ho and x < Wo)
    y_ref    : (1, Cout, HW)     f32   conv output (lane-dense; invalid pixels = garbage)
    stats_ref: (1, Cout, 2)      f32   per-image (sum, sum of squares) over valid pixels
    """
    cout = w_ref.shape[1]
    acc = jnp.zeros((cout, HW), dtype=jnp.float32)
    # out[co, y*W + x] = sum_{kh,kw,ci} w[kh,kw,co,ci] * x_flat[ci, y*W + x + kh*W + kw]
    for kh in range(K):
        for kw in range(K):
            t = kh * K + kw
            s = kh * W + kw                       # static shift along the flattened axis
            x_win = x_ref[0, :, s:s + HW]         # (Cin, HW)
            acc = acc + jnp.dot(w_ref[t], x_win, preferred_element_type=jnp.float32)

    y_ref[0, :, :] = acc

    mask = mask_ref[...]                          # (1, HW), broadcasts over channels
    masked = acc * mask
    stats_ref[0, :, 0:1] = jnp.sum(masked, axis=1, keepdims=True)
    stats_ref[0, :, 1:2] = jnp.sum(masked * acc, axis=1, keepdims=True)


def _bn_relu_kernel(y_ref, scale_ref, shift_ref, out_ref):
    """Pass 2: fused BatchNorm affine (y*scale + shift) + ReLU, lane-dense stores."""
    out_ref[...] = jnp.maximum(y_ref[...] * scale_ref[...] + shift_ref[...], 0.0)


def conv_layer(x, weight, bias, gamma, beta, *, kernel_size=3, stride=1, eps=1e-5):
    """Forward of ConvLayer: Conv2d(K, stride=1, padding='valid') -> BatchNorm2d(train) -> ReLU.

    x      : (N, Cin, H, W)     float32, NCHW (PyTorch convention)
    weight : (Cout, Cin, K, K)  Conv2d weight
    bias   : (Cout,)            Conv2d bias (exactly cancelled by train-mode BN)
    gamma  : (Cout,)            BatchNorm2d weight
    beta   : (Cout,)            BatchNorm2d bias
    returns (N, Cout, Ho, Wo) with Ho = H-K+1, Wo = W-K+1
    """
    assert stride == 1, "module default stride=1"  # TODO(synk): general stride support
    del bias  # y - mean(y) is invariant to a per-channel bias; train-mode BN cancels it.

    N, Cin, H, W = x.shape
    K = kernel_size
    Cout = weight.shape[0]
    Ho, Wo = H - K + 1, W - K + 1
    HW = H * W
    Lpad = HW + (K - 1) * (W + 1)          # max shift = (K-1)*W + (K-1)

    # Flatten spatial dims (free reshape) and zero-pad the tail so every shifted window
    # is in-bounds. bf16 halves HBM traffic on the dominant input stream; accumulation
    # stays f32 inside the kernel.
    x_flat = x.reshape(N, Cin, HW)
    x_flat = jnp.pad(x_flat, ((0, 0), (0, 0), (0, Lpad - HW))).astype(jnp.bfloat16)

    # (Cout, Cin, K, K) -> (K*K, Cout, Cin): one (Cout, Cin) matrix per tap.
    w_taps = jnp.transpose(weight, (2, 3, 0, 1)).reshape(K * K, Cout, Cin).astype(jnp.bfloat16)

    # Validity mask over the flattened (H, W) grid: pixels with y < Ho and x < Wo are
    # real conv outputs; the rest are wrap-around garbage that is cropped at the end.
    yy, xx = jnp.meshgrid(jnp.arange(H), jnp.arange(W), indexing="ij")
    mask = ((yy < Ho) & (xx < Wo)).astype(jnp.float32).reshape(1, HW)

    kernel1 = functools.partial(_conv_stats_kernel, K=K, W=W, HW=HW)
    y_full, stats = pl.pallas_call(
        kernel1,
        out_shape=(jax.ShapeDtypeStruct((N, Cout, HW), jnp.float32),
                   jax.ShapeDtypeStruct((N, Cout, 2), jnp.float32)),
        grid=(N,),
        in_specs=[
            pl.BlockSpec((1, Cin, Lpad), lambda n: (n, 0, 0)),
            pl.BlockSpec((K * K, Cout, Cin), lambda n: (0, 0, 0)),
            pl.BlockSpec((1, HW), lambda n: (0, 0)),
        ],
        out_specs=(
            pl.BlockSpec((1, Cout, HW), lambda n: (n, 0, 0)),
            pl.BlockSpec((1, Cout, 2), lambda n: (n, 0, 0)),
        ),
        compiler_params=pltpu.CompilerParams(
            dimension_semantics=("parallel",),        # v7x: split images across 2 TCs
            vmem_limit_bytes=32 * 1024 * 1024),       # tiny working set, explicit for v7x
    )(x_flat, w_taps, mask)

    # Combine per-image partial stats (tiny (N, Cout, 2) reduction) and fold BN into a
    # single per-channel scale/shift.  Biased variance matches PyTorch train-mode BN.
    count = N * Ho * Wo
    tot = jnp.sum(stats, axis=0)                     # (Cout, 2)
    mean = tot[:, 0] / count
    var = tot[:, 1] / count - mean * mean
    inv_std = jax.lax.rsqrt(var + eps)
    scale = (gamma * inv_std).astype(jnp.float32).reshape(1, Cout, 1)
    shift = (beta - mean * gamma * inv_std).astype(jnp.float32).reshape(1, Cout, 1)

    out_full = pl.pallas_call(
        _bn_relu_kernel,
        out_shape=jax.ShapeDtypeStruct((N, Cout, HW), jnp.float32),
        grid=(N,),
        in_specs=[
            pl.BlockSpec((1, Cout, HW), lambda n: (n, 0, 0)),
            pl.BlockSpec((1, Cout, 1), lambda n: (0, 0, 0)),
            pl.BlockSpec((1, Cout, 1), lambda n: (0, 0, 0)),
        ],
        out_specs=pl.BlockSpec((1, Cout, HW), lambda n: (n, 0, 0)),
        compiler_params=pltpu.CompilerParams(
            dimension_semantics=("parallel",),
            vmem_limit_bytes=32 * 1024 * 1024),
    )(y_full, scale, shift)

    # Free reshape to NCHW over the full (H, W) grid, then crop the garbage region.
    return out_full.reshape(N, Cout, H, W)[:, :, :Ho, :Wo]


def _reference(x, weight, bias, gamma, beta, *, kernel_size=3, eps=1e-5):
    """Pure-JAX/XLA reference: valid conv + bias, train-mode BN (biased var), ReLU."""
    y = jax.lax.conv_general_dilated(
        x, weight, window_strides=(1, 1), padding="VALID",
        dimension_numbers=("NCHW", "OIHW", "NCHW"),
    ) + bias[None, :, None, None]
    mean = jnp.mean(y, axis=(0, 2, 3), keepdims=True)
    var = jnp.mean((y - mean) ** 2, axis=(0, 2, 3), keepdims=True)
    y_hat = (y - mean) * jax.lax.rsqrt(var + eps)
    y_hat = y_hat * gamma[None, :, None, None] + beta[None, :, None, None]
    return jnp.maximum(y_hat, 0.0)


if __name__ == "__main__":
    key = jax.random.PRNGKey(0)
    k_x, k_w, k_b, k_g, k_be = jax.random.split(key, 5)

    N, Cin, H, W = 2, 4, 16, 16
    Cout, K = 8, 3

    x = jax.random.normal(k_x, (N, Cin, H, W), dtype=jnp.float32)
    weight = jax.random.normal(k_w, (Cout, Cin, K, K), dtype=jnp.float32) * 0.1
    bias = jax.random.normal(k_b, (Cout,), dtype=jnp.float32) * 0.1
    gamma = 1.0 + 0.1 * jax.random.normal(k_g, (Cout,), dtype=jnp.float32)
    beta = 0.1 * jax.random.normal(k_be, (Cout,), dtype=jnp.float32)

    out = conv_layer(x, weight, bias, gamma, beta, kernel_size=K, stride=1)
    out = jax.block_until_ready(out)
    assert out.shape == (N, Cout, H - K + 1, W - K + 1), out.shape

    # Tight structural check: reference fed the same bf16-rounded inputs the kernel uses.
    x_bf = x.astype(jnp.bfloat16).astype(jnp.float32)
    w_bf = weight.astype(jnp.bfloat16).astype(jnp.float32)
    ref_tight = _reference(x_bf, w_bf, bias, gamma, beta, kernel_size=K)
    err_t = float(jnp.max(jnp.abs(out - ref_tight)))
    assert jnp.allclose(out, ref_tight, atol=2e-3, rtol=2e-3), err_t

    # Loose end-to-end check vs the full-f32 module semantics (slack for bf16 matmul inputs).
    ref = _reference(x, weight, bias, gamma, beta, kernel_size=K)
    err = float(jnp.max(jnp.abs(out - ref)))
    assert jnp.allclose(out, ref, atol=1e-1, rtol=1e-1), err

    print("KERNEL_OK")
</pallas_src>

<mosaic_0001>
module attributes {stable_mosaic.version = 11 : i64} {
  func.func @_conv_stats_kernel(%arg0: i32, %arg1: memref<1x4x290xbf16, #tpu.memory_space<vmem>>, %arg2: memref<9x8x4xbf16, #tpu.memory_space<vmem>>, %arg3: memref<1x256xf32, #tpu.memory_space<vmem>>, %arg4: memref<1x8x256xf32, #tpu.memory_space<vmem>>, %arg5: memref<1x8x2xf32, #tpu.memory_space<vmem>>) attributes {dimension_semantics = [#tpu.dimension_semantics<parallel>], iteration_bounds = array<i64: 2>, scalar_prefetch = 0 : i64, scratch_operands = 0 : i64, tpu.core_type = #tpu.core_type<tc>, window_params = [{transform_indices = @transform_0, window_bounds = array<i64: 1, 4, 290>}, {pipeline_mode = #tpu.pipeline_mode<synchronous>, transform_indices = @transform_1, window_bounds = array<i64: 9, 8, 4>}, {pipeline_mode = #tpu.pipeline_mode<synchronous>, transform_indices = @transform_2, window_bounds = array<i64: 1, 256>}, {transform_indices = @transform_3, window_bounds = array<i64: 1, 8, 256>}, {transform_indices = @transform_4, window_bounds = array<i64: 1, 8, 2>}]} {
    %cst = arith.constant 0.000000e+00 : f32
    %0 = vector.broadcast %cst : f32 to vector<8x256xf32>
    %c0 = arith.constant 0 : index
    %c0_0 = arith.constant 0 : index
    %c0_1 = arith.constant 0 : index
    %1 = vector.load %arg1[%c0, %c0_0, %c0_1] : memref<1x4x290xbf16, #tpu.memory_space<vmem>>, vector<1x4x256xbf16>
    %2 = vector.shape_cast %1 : vector<1x4x256xbf16> to vector<4x256xbf16>
    %c0_2 = arith.constant 0 : index
    %c0_3 = arith.constant 0 : index
    %c0_4 = arith.constant 0 : index
    %3 = vector.load %arg2[%c0_2, %c0_3, %c0_4] : memref<9x8x4xbf16, #tpu.memory_space<vmem>>, vector<1x8x4xbf16>
    %4 = vector.shape_cast %3 : vector<1x8x4xbf16> to vector<8x4xbf16>
    %cst_5 = arith.constant dense<0.000000e+00> : vector<8x256xf32>
    %5 = tpu.matmul %4, %2, %cst_5 {dimension_numbers = #tpu.dot_dimension_numbers<[1], [0], [0], [1], [0, 0, 1, 1], [], []>} : vector<8x4xbf16>, vector<4x256xbf16>, vector<8x256xf32> -> vector<8x256xf32>
    %6 = arith.addf %0, %5 : vector<8x256xf32>
    %c0_6 = arith.constant 0 : index
    %c0_7 = arith.constant 0 : index
    %c1 = arith.constant 1 : index
    %7 = vector.load %arg1[%c0_6, %c0_7, %c1] : memref<1x4x290xbf16, #tpu.memory_space<vmem>>, vector<1x4x256xbf16>
    %8 = vector.shape_cast %7 : vector<1x4x256xbf16> to vector<4x256xbf16>
    %c1_8 = arith.constant 1 : index
    %c0_9 = arith.constant 0 : index
    %c0_10 = arith.constant 0 : index
    %9 = vector.load %arg2[%c1_8, %c0_9, %c0_10] : memref<9x8x4xbf16, #tpu.memory_space<vmem>>, vector<1x8x4xbf16>
    %10 = vector.shape_cast %9 : vector<1x8x4xbf16> to vector<8x4xbf16>
    %cst_11 = arith.constant dense<0.000000e+00> : vector<8x256xf32>
    %11 = tpu.matmul %10, %8, %cst_11 {dimension_numbers = #tpu.dot_dimension_numbers<[1], [0], [0], [1], [0, 0, 1, 1], [], []>} : vector<8x4xbf16>, vector<4x256xbf16>, vector<8x256xf32> -> vector<8x256xf32>
    %12 = arith.addf %6, %11 : vector<8x256xf32>
    %c0_12 = arith.constant 0 : index
    %c0_13 = arith.constant 0 : index
    %c2 = arith.constant 2 : index
    %13 = vector.load %arg1[%c0_12, %c0_13, %c2] : memref<1x4x290xbf16, #tpu.memory_space<vmem>>, vector<1x4x256xbf16>
    %14 = vector.shape_cast %13 : vector<1x4x256xbf16> to vector<4x256xbf16>
    %c2_14 = arith.constant 2 : index
    %c0_15 = arith.constant 0 : index
    %c0_16 = arith.constant 0 : index
    %15 = vector.load %arg2[%c2_14, %c0_15, %c0_16] : memref<9x8x4xbf16, #tpu.memory_space<vmem>>, vector<1x8x4xbf16>
    %16 = vector.shape_cast %15 : vector<1x8x4xbf16> to vector<8x4xbf16>
    %cst_17 = arith.constant dense<0.000000e+00> : vector<8x256xf32>
    %17 = tpu.matmul %16, %14, %cst_17 {dimension_numbers = #tpu.dot_dimension_numbers<[1], [0], [0], [1], [0, 0, 1, 1], [], []>} : vector<8x4xbf16>, vector<4x256xbf16>, vector<8x256xf32> -> vector<8x256xf32>
    %18 = arith.addf %12, %17 : vector<8x256xf32>
    %c0_18 = arith.constant 0 : index
    %c0_19 = arith.constant 0 : index
    %c16 = arith.constant 16 : index
    %19 = vector.load %arg1[%c0_18, %c0_19, %c16] : memref<1x4x290xbf16, #tpu.memory_space<vmem>>, vector<1x4x256xbf16>
    %20 = vector.shape_cast %19 : vector<1x4x256xbf16> to vector<4x256xbf16>
    %c3 = arith.constant 3 : index
    %c0_20 = arith.constant 0 : index
    %c0_21 = arith.constant 0 : index
    %21 = vector.load %arg2[%c3, %c0_20, %c0_21] : memref<9x8x4xbf16, #tpu.memory_space<vmem>>, vector<1x8x4xbf16>
    %22 = vector.shape_cast %21 : vector<1x8x4xbf16> to vector<8x4xbf16>
    %cst_22 = arith.constant dense<0.000000e+00> : vector<8x256xf32>
    %23 = tpu.matmul %22, %20, %cst_22 {dimension_numbers = #tpu.dot_dimension_numbers<[1], [0], [0], [1], [0, 0, 1, 1], [], []>} : vector<8x4xbf16>, vector<4x256xbf16>, vector<8x256xf32> -> vector<8x256xf32>
    %24 = arith.addf %18, %23 : vector<8x256xf32>
    %c0_23 = arith.constant 0 : index
    %c0_24 = arith.constant 0 : index
    %c17 = arith.constant 17 : index
    %25 = vector.load %arg1[%c0_23, %c0_24, %c17] : memref<1x4x290xbf16, #tpu.memory_space<vmem>>, vector<1x4x256xbf16>
    %26 = vector.shape_cast %25 : vector<1x4x256xbf16> to vector<4x256xbf16>
    %c4 = arith.constant 4 : index
    %c0_25 = arith.constant 0 : index
    %c0_26 = arith.constant 0 : index
    %27 = vector.load %arg2[%c4, %c0_25, %c0_26] : memref<9x8x4xbf16, #tpu.memory_space<vmem>>, vector<1x8x4xbf16>
    %28 = vector.shape_cast %27 : vector<1x8x4xbf16> to vector<8x4xbf16>
    %cst_27 = arith.constant dense<0.000000e+00> : vector<8x256xf32>
    %29 = tpu.matmul %28, %26, %cst_27 {dimension_numbers = #tpu.dot_dimension_numbers<[1], [0], [0], [1], [0, 0, 1, 1], [], []>} : vector<8x4xbf16>, vector<4x256xbf16>, vector<8x256xf32> -> vector<8x256xf32>
    %30 = arith.addf %24, %29 : vector<8x256xf32>
    %c0_28 = arith.constant 0 : index
    %c0_29 = arith.constant 0 : index
    %c18 = arith.constant 18 : index
    %31 = vector.load %arg1[%c0_28, %c0_29, %c18] : memref<1x4x290xbf16, #tpu.memory_space<vmem>>, vector<1x4x256xbf16>
    %32 = vector.shape_cast %31 : vector<1x4x256xbf16> to vector<4x256xbf16>
    %c5 = arith.constant 5 : index
    %c0_30 = arith.constant 0 : index
    %c0_31 = arith.constant 0 : index
    %33 = vector.load %arg2[%c5, %c0_30, %c0_31] : memref<9x8x4xbf16, #tpu.memory_space<vmem>>, vector<1x8x4xbf16>
    %34 = vector.shape_cast %33 : vector<1x8x4xbf16> to vector<8x4xbf16>
    %cst_32 = arith.constant dense<0.000000e+00> : vector<8x256xf32>
    %35 = tpu.matmul %34, %32, %cst_32 {dimension_numbers = #tpu.dot_dimension_numbers<[1], [0], [0], [1], [0, 0, 1, 1], [], []>} : vector<8x4xbf16>, vector<4x256xbf16>, vector<8x256xf32> -> vector<8x256xf32>
    %36 = arith.addf %30, %35 : vector<8x256xf32>
    %c0_33 = arith.constant 0 : index
    %c0_34 = arith.constant 0 : index
    %c32 = arith.constant 32 : index
    %37 = vector.load %arg1[%c0_33, %c0_34, %c32] : memref<1x4x290xbf16, #tpu.memory_space<vmem>>, vector<1x4x256xbf16>
    %38 = vector.shape_cast %37 : vector<1x4x256xbf16> to vector<4x256xbf16>
    %c6 = arith.constant 6 : index
    %c0_35 = arith.constant 0 : index
    %c0_36 = arith.constant 0 : index
    %39 = vector.load %arg2[%c6, %c0_35, %c0_36] : memref<9x8x4xbf16, #tpu.memory_space<vmem>>, vector<1x8x4xbf16>
    %40 = vector.shape_cast %39 : vector<1x8x4xbf16> to vector<8x4xbf16>
    %cst_37 = arith.constant dense<0.000000e+00> : vector<8x256xf32>
    %41 = tpu.matmul %40, %38, %cst_37 {dimension_numbers = #tpu.dot_dimension_numbers<[1], [0], [0], [1], [0, 0, 1, 1], [], []>} : vector<8x4xbf16>, vector<4x256xbf16>, vector<8x256xf32> -> vector<8x256xf32>
    %42 = arith.addf %36, %41 : vector<8x256xf32>
    %c0_38 = arith.constant 0 : index
    %c0_39 = arith.constant 0 : index
    %c33 = arith.constant 33 : index
    %43 = vector.load %arg1[%c0_38, %c0_39, %c33] : memref<1x4x290xbf16, #tpu.memory_space<vmem>>, vector<1x4x256xbf16>
    %44 = vector.shape_cast %43 : vector<1x4x256xbf16> to vector<4x256xbf16>
    %c7 = arith.constant 7 : index
    %c0_40 = arith.constant 0 : index
    %c0_41 = arith.constant 0 : index
    %45 = vector.load %arg2[%c7, %c0_40, %c0_41] : memref<9x8x4xbf16, #tpu.memory_space<vmem>>, vector<1x8x4xbf16>
    %46 = vector.shape_cast %45 : vector<1x8x4xbf16> to vector<8x4xbf16>
    %cst_42 = arith.constant dense<0.000000e+00> : vector<8x256xf32>
    %47 = tpu.matmul %46, %44, %cst_42 {dimension_numbers = #tpu.dot_dimension_numbers<[1], [0], [0], [1], [0, 0, 1, 1], [], []>} : vector<8x4xbf16>, vector<4x256xbf16>, vector<8x256xf32> -> vector<8x256xf32>
    %48 = arith.addf %42, %47 : vector<8x256xf32>
    %c0_43 = arith.constant 0 : index
    %c0_44 = arith.constant 0 : index
    %c34 = arith.constant 34 : index
    %49 = vector.load %arg1[%c0_43, %c0_44, %c34] : memref<1x4x290xbf16, #tpu.memory_space<vmem>>, vector<1x4x256xbf16>
    %50 = vector.shape_cast %49 : vector<1x4x256xbf16> to vector<4x256xbf16>
    %c8 = arith.constant 8 : index
    %c0_45 = arith.constant 0 : index
    %c0_46 = arith.constant 0 : index
    %51 = vector.load %arg2[%c8, %c0_45, %c0_46] : memref<9x8x4xbf16, #tpu.memory_space<vmem>>, vector<1x8x4xbf16>
    %52 = vector.shape_cast %51 : vector<1x8x4xbf16> to vector<8x4xbf16>
    %cst_47 = arith.constant dense<0.000000e+00> : vector<8x256xf32>
    %53 = tpu.matmul %52, %50, %cst_47 {dimension_numbers = #tpu.dot_dimension_numbers<[1], [0], [0], [1], [0, 0, 1, 1], [], []>} : vector<8x4xbf16>, vector<4x256xbf16>, vector<8x256xf32> -> vector<8x256xf32>
    %54 = arith.addf %48, %53 : vector<8x256xf32>
    %c0_48 = arith.constant 0 : index
    %c0_49 = arith.constant 0 : index
    %c0_50 = arith.constant 0 : index
    %55 = vector.load %arg4[%c0_48, %c0_49, %c0_50] : memref<1x8x256xf32, #tpu.memory_space<vmem>>, vector<1x8x256xf32>
    %56 = vector.shape_cast %55 : vector<1x8x256xf32> to vector<8x256xf32>
    %57 = vector.shape_cast %54 : vector<8x256xf32> to vector<1x8x256xf32>
    tpu.vector_store %arg4[%c0_48, %c0_49, %c0_50], %57 {strides = array<i32>} : memref<1x8x256xf32, #tpu.memory_space<vmem>>, vector<1x8x256xf32>,
    %c0_51 = arith.constant 0 : index
    %c0_52 = arith.constant 0 : index
    %58 = vector.load %arg3[%c0_51, %c0_52] : memref<1x256xf32, #tpu.memory_space<vmem>>, vector<1x256xf32>
    %59 = vector.broadcast %58 : vector<1x256xf32> to vector<8x256xf32>
    %60 = arith.mulf %54, %59 : vector<8x256xf32>
    %cst_53 = arith.constant dense<0.000000e+00> : vector<8xf32>
    %61 = vector.multi_reduction <add>, %60, %cst_53 [1] : vector<8x256xf32> to vector<8xf32>
    %62 = vector.shape_cast %61 : vector<8xf32> to vector<8x1xf32>
    %c0_54 = arith.constant 0 : index
    %c0_55 = arith.constant 0 : index
    %c0_56 = arith.constant 0 : index
    %63 = vector.load %arg5[%c0_54, %c0_55, %c0_56] : memref<1x8x2xf32, #tpu.memory_space<vmem>>, vector<1x8x1xf32>
    %64 = vector.shape_cast %63 : vector<1x8x1xf32> to vector<8x1xf32>
    %65 = vector.shape_cast %62 : vector<8x1xf32> to vector<1x8x1xf32>
    tpu.vector_store %arg5[%c0_54, %c0_55, %c0_56], %65 {strides = array<i32>} : memref<1x8x2xf32, #tpu.memory_space<vmem>>, vector<1x8x1xf32>,
    %66 = arith.mulf %60, %54 : vector<8x256xf32>
    %cst_57 = arith.constant dense<0.000000e+00> : vector<8xf32>
    %67 = vector.multi_reduction <add>, %66, %cst_57 [1] : vector<8x256xf32> to vector<8xf32>
    %68 = vector.shape_cast %67 : vector<8xf32> to vector<8x1xf32>
    %c0_58 = arith.constant 0 : index
    %c0_59 = arith.constant 0 : index
    %c1_60 = arith.constant 1 : index
    %69 = vector.load %arg5[%c0_58, %c0_59, %c1_60] : memref<1x8x2xf32, #tpu.memory_space<vmem>>, vector<1x8x1xf32>
    %70 = vector.shape_cast %69 : vector<1x8x1xf32> to vector<8x1xf32>
    %71 = vector.shape_cast %68 : vector<8x1xf32> to vector<1x8x1xf32>
    tpu.vector_store %arg5[%c0_58, %c0_59, %c1_60], %71 {strides = array<i32>} : memref<1x8x2xf32, #tpu.memory_space<vmem>>, vector<1x8x1xf32>,
    return
  }
  func.func @transform_0(%arg0: i32) -> (i32, i32, i32) {
    %c0_i32 = arith.constant 0 : i32
    %c0_i32_0 = arith.constant 0 : i32
    %c0_i32_1 = arith.constant 0 : i32
    return %arg0, %c0_i32, %c0_i32_0 : i32, i32, i32
  }
  func.func @transform_1(%arg0: i32) -> (i32, i32, i32) {
    %c0_i32 = arith.constant 0 : i32
    %c0_i32_0 = arith.constant 0 : i32
    %c0_i32_1 = arith.constant 0 : i32
    %c0_i32_2 = arith.constant 0 : i32
    return %c0_i32, %c0_i32_0, %c0_i32_1 : i32, i32, i32
  }
  func.func @transform_2(%arg0: i32) -> (i32, i32) {
    %c0_i32 = arith.constant 0 : i32
    %c0_i32_0 = arith.constant 0 : i32
    %c0_i32_1 = arith.constant 0 : i32
    return %c0_i32, %c0_i32_0 : i32, i32
  }
  func.func @transform_3(%arg0: i32) -> (i32, i32, i32) {
    %c0_i32 = arith.constant 0 : i32
    %c0_i32_0 = arith.constant 0 : i32
    %c0_i32_1 = arith.constant 0 : i32
    return %arg0, %c0_i32, %c0_i32_0 : i32, i32, i32
  }
  func.func @transform_4(%arg0: i32) -> (i32, i32, i32) {
    %c0_i32 = arith.constant 0 : i32
    %c0_i32_0 = arith.constant 0 : i32
    %c0_i32_1 = arith.constant 0 : i32
    return %arg0, %c0_i32, %c0_i32_0 : i32, i32, i32
  }
}

</mosaic_0001>

<llo_original>
// kernel: tpu_custom_call.1
$region0: #{tpu_custom_call.1}
  #allocation0 [shape = 'u32[]', space=smem, size = 0x4, offset = 0x4, fixed_abs, tag = 'smem constant byte address 0x4 - core index']
  #allocation1 [shape = 'u32[144,128]{1,0:T(1,128)}', space=vmem, size = 0x12000, scoped, tag = 'internal scratch']
  %s0 = inlined_call_operand.vmem [shape: bf16[2,4,290], index: 0, kind: input, shape index: {}]
  %s1 = inlined_call_operand.vmem [shape: bf16[9,8,4], index: 1, kind: input, shape index: {}]
  %s2 = inlined_call_operand.vmem [shape: f32[1,256], index: 2, kind: input, shape index: {}]
  %s3 = inlined_call_operand.hbm [shape: f32[2,8,256], index: 3, kind: output, shape index: {0}]
  %s4 = inlined_call_operand.vmem [shape: f32[2,8,2], index: 4, kind: output, shape index: {1}]
  %5 = xla_tuple %s3, %s4
  %s6 = sld [smem:[#allocation0]]
  $region53: #{tpu_custom_call.1} parent=0
    _
  %s8 = ssub.s32 1, %s6
  %s9 = scalar_select 0, %s8, %s6
  $region1: #{tpu_custom_call.1} parent=0
    #allocation2 [shape = 'u8[16384]{0}', space=vmem, size = 0x4000, scoped, tag = 'output window, operand 0']
    #allocation3 [shape = 's32[2]{0}', space=sflag, size = 0x8, scoped, tag = 'scoped memory for tpu_custom_call.1']
    %10 = vsyncpa [#allocation3], 0
    %s11 = scalar_lea.sflag [#allocation3], 1
    %12 = vsyncpa %s11, 0
    loop: start=0, step=1, limit=4
    $region2: #{tpu_custom_call.1} parent=1 // loop_pre_header
      _
    $region3: #{tpu_custom_call.1} parent=1 // loop_header
      %s14 = sphi 0, %s18
      %p15 = scmp.ge.s32.totalorder %s14, 4
      %s24 = sphi 0, %s26
      %s27 = sphi 0, %s24
      %s28 = sphi 0, %s27
      %s44 = sphi 0, %s28
      %s48 = sphi 0, %s48
      %s50 = sphi 0, %s48
      %s51 = sphi 0, %s50
      %s65 = sphi 0, %s51
      %s69 = sphi 0, %s69
      %s71 = sphi 0, %s69
      %s72 = sphi 0, %s71
      %s86 = sphi 0, %s72
      %s92 = sphi 0, %s94
      %s95 = sphi 0, %s92
      %s96 = sphi 0, %s95
      %s112 = sphi 0, %s96
      %s118 = sphi 0, %s120
      %s121 = sphi 0, %s118
      %s122 = sphi 0, %s121
      %s138 = sphi 0, %s122
    $region4: #{tpu_custom_call.1} parent=1 // loop_header_branch
      %17 = sbr.rel (%p15) target = $region8
    $region5: #{tpu_custom_call.1} parent=1 // loop_body
      %s19 = ssub.s32 %s14, 1
      %s20 = ssub.s32 %s14, 2
      %s21 = sadd.s32 %s14, 1
      %s22 = ssub.s32 %s14, %s21
      %p23 = scmp.eq.s32.totalorder %s22, 0
      %s25 = sadd.s32 %s24, 1
      %s26 = scalar_select %p23, %s24, %s25
      %p29 = pneg %p23
      %p30 = scmp.eq.s32.totalorder %s14, 1
      %p31 = por %p29, %p30
      %p32 = scmp.ne.s32.totalorder %s24, %s27
      %p33 = scmp.eq.s32.totalorder %s14, 0
      %p34 = por %p32, %p33
      %p35 = scmp.ne.s32.totalorder %s24, %s27
      %p36 = scmp.eq.s32.totalorder %s19, 1
      %p37 = por %p35, %p36
      %p38 = scmp.ne.s32.totalorder %s27, %s28
      %p39 = scmp.eq.s32.totalorder %s19, 0
      %p40 = por %p38, %p39
      %p41 = scmp.ne.s32.totalorder %s27, %s28
      %p42 = scmp.eq.s32.totalorder %s20, 1
      %p43 = por %p41, %p42
      %p45 = scmp.ne.s32.totalorder %s28, %s44
      %p46 = scmp.eq.s32.totalorder %s20, 0
      %p47 = por %p45, %p46
      %s49 = sadd.s32 %s48, 1
      %p52 = scmp.eq.s32.totalorder %s14, 1
      %p53 = scmp.ne.s32.totalorder %s48, %s50
      %p54 = scmp.eq.s32.totalorder %s14, 0
      %p55 = por %p53, %p54
      %p56 = scmp.ne.s32.totalorder %s48, %s50
      %p57 = scmp.eq.s32.totalorder %s19, 1
      %p58 = por %p56, %p57
      %p59 = scmp.ne.s32.totalorder %s50, %s51
      %p60 = scmp.eq.s32.totalorder %s19, 0
      %p61 = por %p59, %p60
      %p62 = scmp.ne.s32.totalorder %s50, %s51
      %p63 = scmp.eq.s32.totalorder %s20, 1
      %p64 = por %p62, %p63
      %p66 = scmp.ne.s32.totalorder %s51, %s65
      %p67 = scmp.eq.s32.totalorder %s20, 0
      %p68 = por %p66, %p67
      %s70 = sadd.s32 %s69, 1
      %p73 = scmp.eq.s32.totalorder %s14, 1
      %p74 = scmp.ne.s32.totalorder %s69, %s71
      %p75 = scmp.eq.s32.totalorder %s14, 0
      %p76 = por %p74, %p75
      %p77 = scmp.ne.s32.totalorder %s69, %s71
      %p78 = scmp.eq.s32.totalorder %s19, 1
      %p79 = por %p77, %p78
      %p80 = scmp.ne.s32.totalorder %s71, %s72
      %p81 = scmp.eq.s32.totalorder %s19, 0
      %p82 = por %p80, %p81
      %p83 = scmp.ne.s32.totalorder %s71, %s72
      %p84 = scmp.eq.s32.totalorder %s20, 1
      %p85 = por %p83, %p84
      %p87 = scmp.ne.s32.totalorder %s72, %s86
      %p88 = scmp.eq.s32.totalorder %s20, 0
      %p89 = por %p87, %p88
      %s90 = ssub.s32 %s14, %s21
      %p91 = scmp.eq.s32.totalorder %s90, 0
      %s93 = sadd.s32 %s92, 1
      %s94 = scalar_select %p91, %s92, %s93
      %p97 = pneg %p91
      %p98 = scmp.eq.s32.totalorder %s14, 1
      %p99 = por %p97, %p98
      %p100 = scmp.ne.s32.totalorder %s92, %s95
      %p101 = scmp.eq.s32.totalorder %s14, 0
      %p102 = por %p100, %p101
      %p103 = scmp.ne.s32.totalorder %s92, %s95
      %p104 = scmp.eq.s32.totalorder %s19, 1
      %p105 = por %p103, %p104
      %p106 = scmp.ne.s32.totalorder %s95, %s96
      %p107 = scmp.eq.s32.totalorder %s19, 0
      %p108 = por %p106, %p107
      %p109 = scmp.ne.s32.totalorder %s95, %s96
      %p110 = scmp.eq.s32.totalorder %s20, 1
      %p111 = por %p109, %p110
      %p113 = scmp.ne.s32.totalorder %s96, %s112
      %p114 = scmp.eq.s32.totalorder %s20, 0
      %p115 = por %p113, %p114
      %s116 = ssub.s32 %s14, %s21
      %p117 = scmp.eq.s32.totalorder %s116, 0
      %s119 = sadd.s32 %s118, 1
      %s120 = scalar_select %p117, %s118, %s119
      %p123 = pneg %p117
      %p124 = scmp.eq.s32.totalorder %s14, 1
      %p125 = por %p123, %p124
      %p126 = scmp.ne.s32.totalorder %s118, %s121
      %p127 = scmp.eq.s32.totalorder %s14, 0
      %p128 = por %p126, %p127
      %p129 = scmp.ne.s32.totalorder %s118, %s121
      %p130 = scmp.eq.s32.totalorder %s19, 1
      %p131 = por %p129, %p130
      %p132 = scmp.ne.s32.totalorder %s121, %s122
      %p133 = scmp.eq.s32.totalorder %s19, 0
      %p134 = por %p132, %p133
      %p135 = scmp.ne.s32.totalorder %s121, %s122
      %p136 = scmp.eq.s32.totalorder %s20, 1
      %p137 = por %p135, %p136
      %p139 = scmp.ne.s32.totalorder %s122, %s138
      %p140 = scmp.eq.s32.totalorder %s20, 0
      %p141 = por %p139, %p140
      %p142 = scmp.le.s32.totalorder 1, %s14
      %p143 = scmp.lt.s32.totalorder %s14, 3
      %p144 = pnand %p142, %p143
      %p145 = pneg %p144
      // Predicated region
      $region9: #{tpu_custom_call.1} parent=5 // pred_check
        _
      $region10: #{tpu_custom_call.1} parent=5 // pred_check_branch
        %147 = sbr.rel (%p144) target = $region12
      $region11: #{tpu_custom_call.1} parent=5 // pred_region
        %s148 = ssub.s32 %s14, 1
        // Predicated region
        $region13: #{tpu_custom_call.1} parent=11 // pred_check
          %p149 = pneg %p61
        $region14: #{tpu_custom_call.1} parent=11 // pred_check_branch
          %151 = sbr.rel (%p149) target = $region16
        $region15: #{tpu_custom_call.1} parent=11 // pred_region
          _
        $region16: #{tpu_custom_call.1} parent=11 // pred_fallthru
          _
        // Predicated region
        $region17: #{tpu_custom_call.1} parent=11 // pred_check
          %p152 = pneg %p82
        $region18: #{tpu_custom_call.1} parent=11 // pred_check_branch
          %154 = sbr.rel (%p152) target = $region20
        $region19: #{tpu_custom_call.1} parent=11 // pred_region
          _
        $region20: #{tpu_custom_call.1} parent=11 // pred_fallthru
          _
      $region12: #{tpu_custom_call.1} parent=5 // pred_fallthru
        _
      %p155 = scmp.lt.s32.totalorder %s14, 2
      // Predicated region
      $region21: #{tpu_custom_call.1} parent=5 // pred_check
        %p156 = pneg %p155
      $region22: #{tpu_custom_call.1} parent=5 // pred_check_branch
        %158 = sbr.rel (%p156) target = $region24
      $region23: #{tpu_custom_call.1} parent=5 // pred_region
        // Predicated region
        $region25: #{tpu_custom_call.1} parent=23 // pred_check
          %p159 = pneg %p34
        $region26: #{tpu_custom_call.1} parent=23 // pred_check_branch
          %161 = sbr.rel (%p159) target = $region28
        $region27: #{tpu_custom_call.1} parent=23 // pred_region
          %p162 = scmp.lt.s32.totalorder %s14, 1
          %s163 = scalar_select %p162, %s14, 1
          %s164 = smul.addr %s163, 3
          %s165 = smul.addr %s164, 2
          %s166 = scalar_lea.vmem %s0, %s165
        $region28: #{tpu_custom_call.1} parent=23 // pred_fallthru
          _
      $region24: #{tpu_custom_call.1} parent=5 // pred_fallthru
        _
      %p167 = scmp.le.s32.totalorder 1, %s14
      %p168 = scmp.lt.s32.totalorder %s14, 3
      %p169 = pnand %p167, %p168
      %p170 = pneg %p169
      // Predicated region
      $region29: #{tpu_custom_call.1} parent=5 // pred_check
        _
      $region30: #{tpu_custom_call.1} parent=5 // pred_check_branch
        %172 = sbr.rel (%p169) target = $region32
      $region31: #{tpu_custom_call.1} parent=5 // pred_region
        %s173 = ssub.s32 %s14, 1
        %p174 = scmp.lt.s32.totalorder %s19, 1
        %s175 = scalar_select %p174, %s19, 1
        %s176 = smul.addr %s175, 3
        %s177 = smul.addr %s176, 2
        %s178 = scalar_lea.vmem %s0, %s177
        %p179 = pneg %p40
        %p180 = pneg %p37
        %p181 = pneg %p61
        %p182 = pneg %p58
        %p183 = pneg %p82
        %p184 = pneg %p79
        %p185 = pneg %p108
        %p186 = pneg %p105
        %s187 = sand.u32 %s95, 1
        %s188 = scalar_lea.sflag [#allocation3], %s187
        %s189 = sand.u32 %s95, 1
        %s190 = smul.addr %s189, 16
        %s191 = scalar_lea.vmem [#allocation2], %s190
        %p192 = pneg %p134
        %p193 = pneg %p131
        %p194 = scmp.lt.s32.totalorder %s19, 1
        %s195 = scalar_select %p194, %s19, 1
        %s196 = smul.addr %s195, 8
        %s197 = scalar_lea.vmem %s4, %s196
        %p198 = scmp.lt.s32.totalorder %s19, 1
        %s199 = scalar_select %p198, %s19, 1
        %s200 = smul.addr %s199, 3
        %s201 = smul.addr %s200, 2
        %s202 = scalar_lea.vmem %s0, %s201
        %p203 = scmp.lt.s32.totalorder %s19, 1
        %s204 = scalar_select %p203, %s19, 1
        %s205 = smul.addr %s204, 8
        %s206 = scalar_lea.vmem %s4, %s205
        %v208 = vld [vmem:[%s202] sm:$0xf]
        %v209 = vld [vmem:[%s1] sm:$0xf]
        %v210 = vld [vmem:[%s202] sm:$0x3f]
        %s211 = scalar_lea.vmem %s1, 4
        %v212 = vld [vmem:[%s211] sm:$0xf]
        %v214 = vcombine.high %v210, %v210
        %v216 = vunpack.c.l.s4 1983009808
        %v217 = vunpack.c.0.s8 %v216
        %v218 = vlaneseq
        %v219 = vshrl.u32 %v218, 7
        %v220 = vsub.s32 %v217, %v219
        %v221 = vrot.slane %v210, %v220
        %v223 = vunpack.c.l.s4 1983009808
        %v224 = vunpack.c.0.s8 %v223
        %v225 = vlaneseq
        %v226 = vshrl.u32 %v225, 7
        %v227 = vsub.s32 %v224, %v226
        %v228 = vrot.slane %v214, %v227
        %v229 = vcombine.high %v221, %v221
        %230 = vrot.lane.b32.xlu0 %v221, 127
        %v231 = vpop.permute.xlu0 %230
        %232 = vrot.lane.b32.xlu0 %v229, 127
        %v233 = vpop.permute.xlu0 %232
        %234 = vrot.lane.b32.xlu0 %v228, 127
        %v235 = vpop.permute.xlu0 %234
        %vm236 = vcmask 1039360
        %v237 = vsel %vm236, %v231, %v233
        %v238 = vsel %vm236, %v233, %v235
        %vm239 = vcmask 31744
        %v241 = vsel %vm239, %v212, 0
        %vm243 = vcmask 1041408
        %v245 = vsel %vm243, %v237, 0
        %v248 = vsel %vm243, %v238, 0
        %250 = vmatprep.subr.bf16.mxu0 %v248
        %251 = vmatpush1.bf16.msra.mxu0 %v245
        %252 = vmatprep.subr.bf16.mxu0 0
        %253 = vmatpush1.bf16.msra.mxu0 0
        %254 = vmatprep.subr.bf16.mxu0 0
        %255 = vmatpush1.bf16.msra.mxu0 0
        %256 = vmatprep.subr.bf16.mxu0 0
        %257 = vmatpush1.bf16.msra.mxu0 0
        %258 = vmatprep.subr.bf16.mxu0 0
        %259 = vmatpush1.bf16.msra.mxu0 0
        %260 = vmatprep.subr.bf16.mxu0 0
        %261 = vmatpush1.bf16.msra.mxu0 0
        %262 = vmatprep.subr.bf16.mxu0 0
        %263 = vmatpush1.bf16.msra.mxu0 0
        %264 = vmatprep.subr.bf16.mxu0 0
        %265 = vmatpush1.bf16.msra.mxu0 0
        %266 = vmatprep.subr.bf16.mxu0 0
        %267 = vmatpush1.bf16.msra.mxu0 0
        %268 = vmatprep.subr.bf16.mxu0 0
        %269 = vmatpush1.bf16.msra.mxu0 0
        %270 = vmatprep.subr.bf16.mxu0 0
        %271 = vmatpush1.bf16.msra.mxu0 0
        %272 = vmatprep.subr.bf16.mxu0 0
        %273 = vmatpush1.bf16.msra.mxu0 0
        %274 = vmatprep.subr.bf16.mxu0 0
        %275 = vmatpush1.bf16.msra.mxu0 0
        %276 = vmatprep.subr.bf16.mxu0 0
        %277 = vmatpush1.bf16.msra.mxu0 0
        %278 = vmatprep.subr.bf16.mxu0 0
        %279 = vmatpush1.bf16.msra.mxu0 0
        %280 = vmatprep.subr.bf16.mxu0 0
        %281 = vmatpush1.bf16.msra.mxu0 0
        %282 = vmatprep.mubr.bf16.mxu0 0
        %283 = vmatmul.mubr.bf16.gmra.mrb[0].mxu0 %v241
        %v284 = vpop.f32.mrb[0].mxu0
        %v285 = vadd.f32 0.0, %v284
        %v286 = vpop.f32.mrb[0].mxu0
        %v287 = vadd.f32 0.0, %v286
        %v288 = vpop.f32.mrb[0].mxu0
        %v289 = vpop.f32.mrb[0].mxu0
        %290 = vdwg.mxu0
        %v293 = vunpack.c.l.s4 1983009808
        %v294 = vunpack.c.0.s8 %v293
        %v295 = vlaneseq
        %v296 = vshrl.u32 %v295, 7
        %v297 = vsub.s32 %v294, %v296
        %v298 = vrot.slane %v208, %v297
        %v299 = vcombine.high %v298, %v298
        %v301 = vsel %vm239, %v209, 0
        %v304 = vsel %vm243, %v298, 0
        %v307 = vsel %vm243, %v299, 0
        %309 = vmatprep.subr.bf16.mxu0 %v307
        %310 = vmatpush1.bf16.msra.mxu0 %v304
        %311 = vmatprep.subr.bf16.mxu0 0
        %312 = vmatpush1.bf16.msra.mxu0 0
        %313 = vmatprep.subr.bf16.mxu0 0
        %314 = vmatpush1.bf16.msra.mxu0 0
        %315 = vmatprep.subr.bf16.mxu0 0
        %316 = vmatpush1.bf16.msra.mxu0 0
        %317 = vmatprep.subr.bf16.mxu0 0
        %318 = vmatpush1.bf16.msra.mxu0 0
        %319 = vmatprep.subr.bf16.mxu0 0
        %320 = vmatpush1.bf16.msra.mxu0 0
        %321 = vmatprep.subr.bf16.mxu0 0
        %322 = vmatpush1.bf16.msra.mxu0 0
        %323 = vmatprep.subr.bf16.mxu0 0
        %324 = vmatpush1.bf16.msra.mxu0 0
        %325 = vmatprep.subr.bf16.mxu0 0
        %326 = vmatpush1.bf16.msra.mxu0 0
        %327 = vmatprep.subr.bf16.mxu0 0
        %328 = vmatpush1.bf16.msra.mxu0 0
        %329 = vmatprep.subr.bf16.mxu0 0
        %330 = vmatpush1.bf16.msra.mxu0 0
        %331 = vmatprep.subr.bf16.mxu0 0
        %332 = vmatpush1.bf16.msra.mxu0 0
        %333 = vmatprep.subr.bf16.mxu0 0
        %334 = vmatpush1.bf16.msra.mxu0 0
        %335 = vmatprep.subr.bf16.mxu0 0
        %336 = vmatpush1.bf16.msra.mxu0 0
        %337 = vmatprep.subr.bf16.mxu0 0
        %338 = vmatpush1.bf16.msra.mxu0 0
        %339 = vmatprep.subr.bf16.mxu0 0
        %340 = vmatpush1.bf16.msra.mxu0 0
        %341 = vmatprep.mubr.bf16.mxu0 0
        %342 = vmatmul.mubr.bf16.gmra.mrb[0].mxu0 %v301
        %v343 = vpop.f32.mrb[0].mxu0
        %v344 = vadd.f32 %v285, %v343
        %v345 = vpop.f32.mrb[0].mxu0
        %v346 = vadd.f32 %v287, %v345
        %v347 = vpop.f32.mrb[0].mxu0
        %v348 = vpop.f32.mrb[0].mxu0
        %349 = vdwg.mxu0
        %v350 = vld [vmem:[%s202] sm:$0x3f]
        %s351 = scalar_lea.vmem %s1, 8
        %v352 = vld [vmem:[%s351] sm:$0xf]
        %v354 = vcombine.high %v350, %v350
        %v356 = vunpack.c.l.s4 1983009808
        %v357 = vunpack.c.0.s8 %v356
        %v358 = vlaneseq
        %v359 = vshrl.u32 %v358, 7
        %v360 = vsub.s32 %v357, %v359
        %v361 = vrot.slane %v350, %v360
        %v363 = vunpack.c.l.s4 1983009808
        %v364 = vunpack.c.0.s8 %v363
        %v365 = vlaneseq
        %v366 = vshrl.u32 %v365, 7
        %v367 = vsub.s32 %v364, %v366
        %v368 = vrot.slane %v354, %v367
        %v369 = vcombine.high %v361, %v361
        %370 = vrot.lane.b32.xlu0 %v361, 126
        %v371 = vpop.permute.xlu0 %370
        %372 = vrot.lane.b32.xlu0 %v369, 126
        %v373 = vpop.permute.xlu0 %372
        %374 = vrot.lane.b32.xlu0 %v368, 126
        %v375 = vpop.permute.xlu0 %374
        %vm376 = vcmask 1031168
        %v377 = vsel %vm376, %v371, %v373
        %v378 = vsel %vm376, %v373, %v375
        %v380 = vsel %vm239, %v352, 0
        %v383 = vsel %vm243, %v377, 0
        %v386 = vsel %vm243, %v378, 0
        %388 = vmatprep.subr.bf16.mxu0 %v386
        %389 = vmatpush1.bf16.msra.mxu0 %v383
        %390 = vmatprep.subr.bf16.mxu0 0
        %391 = vmatpush1.bf16.msra.mxu0 0
        %392 = vmatprep.subr.bf16.mxu0 0
        %393 = vmatpush1.bf16.msra.mxu0 0
        %394 = vmatprep.subr.bf16.mxu0 0
        %395 = vmatpush1.bf16.msra.mxu0 0
        %396 = vmatprep.subr.bf16.mxu0 0
        %397 = vmatpush1.bf16.msra.mxu0 0
        %398 = vmatprep.subr.bf16.mxu0 0
        %399 = vmatpush1.bf16.msra.mxu0 0
        %400 = vmatprep.subr.bf16.mxu0 0
        %401 = vmatpush1.bf16.msra.mxu0 0
        %402 = vmatprep.subr.bf16.mxu0 0
        %403 = vmatpush1.bf16.msra.mxu0 0
        %404 = vmatprep.subr.bf16.mxu0 0
        %405 = vmatpush1.bf16.msra.mxu0 0
        %406 = vmatprep.subr.bf16.mxu0 0
        %407 = vmatpush1.bf16.msra.mxu0 0
        %408 = vmatprep.subr.bf16.mxu0 0
        %409 = vmatpush1.bf16.msra.mxu0 0
        %410 = vmatprep.subr.bf16.mxu0 0
        %411 = vmatpush1.bf16.msra.mxu0 0
        %412 = vmatprep.subr.bf16.mxu0 0
        %413 = vmatpush1.bf16.msra.mxu0 0
        %414 = vmatprep.subr.bf16.mxu0 0
        %415 = vmatpush1.bf16.msra.mxu0 0
        %416 = vmatprep.subr.bf16.mxu0 0
        %417 = vmatpush1.bf16.msra.mxu0 0
        %418 = vmatprep.subr.bf16.mxu0 0
        %419 = vmatpush1.bf16.msra.mxu0 0
        %420 = vmatprep.mubr.bf16.mxu0 0
        %421 = vmatmul.mubr.bf16.gmra.mrb[0].mxu0 %v380
        %v422 = vpop.f32.mrb[0].mxu0
        %v423 = vadd.f32 0.0, %v422
        %v424 = vpop.f32.mrb[0].mxu0
        %v425 = vadd.f32 0.0, %v424
        %v426 = vpop.f32.mrb[0].mxu0
        %v427 = vpop.f32.mrb[0].mxu0
        %428 = vdwg.mxu0
        %v429 = vadd.f32 %v344, %v423
        %v430 = vadd.f32 %v346, %v425
        %v431 = vld [vmem:[%s202] sm:$0x3f]
        %s432 = scalar_lea.vmem %s1, 12
        %v433 = vld [vmem:[%s432] sm:$0xf]
        %v435 = vcombine.high %v431, %v431
        %v437 = vunpack.c.l.s4 1983009808
        %v438 = vunpack.c.0.s8 %v437
        %v439 = vlaneseq
        %v440 = vshrl.u32 %v439, 7
        %v441 = vsub.s32 %v438, %v440
        %v442 = vrot.slane %v431, %v441
        %v444 = vunpack.c.l.s4 1983009808
        %v445 = vunpack.c.0.s8 %v444
        %v446 = vlaneseq
        %v447 = vshrl.u32 %v446, 7
        %v448 = vsub.s32 %v445, %v447
        %v449 = vrot.slane %v435, %v448
        %v450 = vcombine.high %v442, %v442
        %451 = vrot.lane.b32.xlu0 %v442, 112
        %v452 = vpop.permute.xlu0 %451
        %453 = vrot.lane.b32.xlu0 %v450, 112
        %v454 = vpop.permute.xlu0 %453
        %455 = vrot.lane.b32.xlu0 %v449, 112
        %v456 = vpop.permute.xlu0 %455
        %vm457 = vcmask 916480
        %v458 = vsel %vm457, %v452, %v454
        %v459 = vsel %vm457, %v454, %v456
        %v461 = vsel %vm239, %v433, 0
        %v464 = vsel %vm243, %v458, 0
        %v467 = vsel %vm243, %v459, 0
        %469 = vmatprep.subr.bf16.mxu0 %v467
        %470 = vmatpush1.bf16.msra.mxu0 %v464
        %471 = vmatprep.subr.bf16.mxu0 0
        %472 = vmatpush1.bf16.msra.mxu0 0
        %473 = vmatprep.subr.bf16.mxu0 0
        %474 = vmatpush1.bf16.msra.mxu0 0
        %475 = vmatprep.subr.bf16.mxu0 0
        %476 = vmatpush1.bf16.msra.mxu0 0
        %477 = vmatprep.subr.bf16.mxu0 0
        %478 = vmatpush1.bf16.msra.mxu0 0
        %479 = vmatprep.subr.bf16.mxu0 0
        %480 = vmatpush1.bf16.msra.mxu0 0
        %481 = vmatprep.subr.bf16.mxu0 0
        %482 = vmatpush1.bf16.msra.mxu0 0
        %483 = vmatprep.subr.bf16.mxu0 0
        %484 = vmatpush1.bf16.msra.mxu0 0
        %485 = vmatprep.subr.bf16.mxu0 0
        %486 = vmatpush1.bf16.msra.mxu0 0
        %487 = vmatprep.subr.bf16.mxu0 0
        %488 = vmatpush1.bf16.msra.mxu0 0
        %489 = vmatprep.subr.bf16.mxu0 0
        %490 = vmatpush1.bf16.msra.mxu0 0
        %491 = vmatprep.subr.bf16.mxu0 0
        %492 = vmatpush1.bf16.msra.mxu0 0
        %493 = vmatprep.subr.bf16.mxu0 0
        %494 = vmatpush1.bf16.msra.mxu0 0
        %495 = vmatprep.subr.bf16.mxu0 0
        %496 = vmatpush1.bf16.msra.mxu0 0
        %497 = vmatprep.subr.bf16.mxu0 0
        %498 = vmatpush1.bf16.msra.mxu0 0
        %499 = vmatprep.subr.bf16.mxu0 0
        %500 = vmatpush1.bf16.msra.mxu0 0
        %501 = vmatprep.mubr.bf16.mxu0 0
        %502 = vmatmul.mubr.bf16.gmra.mrb[0].mxu0 %v461
        %v503 = vpop.f32.mrb[0].mxu0
        %v504 = vadd.f32 0.0, %v503
        %v505 = vpop.f32.mrb[0].mxu0
        %v506 = vadd.f32 0.0, %v505
        %v507 = vpop.f32.mrb[0].mxu0
        %v508 = vpop.f32.mrb[0].mxu0
        %509 = vdwg.mxu0
        %v510 = vadd.f32 %v429, %v504
        %v511 = vadd.f32 %v430, %v506
        %v512 = vld [vmem:[%s202] sm:$0x3f]
        %s513 = scalar_lea.vmem %s1, 16
        %v514 = vld [vmem:[%s513] sm:$0xf]
        %v516 = vcombine.high %v512, %v512
        %v518 = vunpack.c.l.s4 1983009808
        %v519 = vunpack.c.0.s8 %v518
        %v520 = vlaneseq
        %v521 = vshrl.u32 %v520, 7
        %v522 = vsub.s32 %v519, %v521
        %v523 = vrot.slane %v512, %v522
        %v525 = vunpack.c.l.s4 1983009808
        %v526 = vunpack.c.0.s8 %v525
        %v527 = vlaneseq
        %v528 = vshrl.u32 %v527, 7
        %v529 = vsub.s32 %v526, %v528
        %v530 = vrot.slane %v516, %v529
        %v531 = vcombine.high %v523, %v523
        %532 = vrot.lane.b32.xlu0 %v523, 111
        %v533 = vpop.permute.xlu0 %532
        %534 = vrot.lane.b32.xlu0 %v531, 111
        %v535 = vpop.permute.xlu0 %534
        %536 = vrot.lane.b32.xlu0 %v530, 111
        %v537 = vpop.permute.xlu0 %536
        %vm538 = vcmask 908288
        %v539 = vsel %vm538, %v533, %v535
        %v540 = vsel %vm538, %v535, %v537
        %v542 = vsel %vm239, %v514, 0
        %v545 = vsel %vm243, %v539, 0
        %v548 = vsel %vm243, %v540, 0
        %550 = vmatprep.subr.bf16.mxu0 %v548
        %551 = vmatpush1.bf16.msra.mxu0 %v545
        %552 = vmatprep.subr.bf16.mxu0 0
        %553 = vmatpush1.bf16.msra.mxu0 0
        %554 = vmatprep.subr.bf16.mxu0 0
        %555 = vmatpush1.bf16.msra.mxu0 0
        %556 = vmatprep.subr.bf16.mxu0 0
        %557 = vmatpush1.bf16.msra.mxu0 0
        %558 = vmatprep.subr.bf16.mxu0 0
        %559 = vmatpush1.bf16.msra.mxu0 0
        %560 = vmatprep.subr.bf16.mxu0 0
        %561 = vmatpush1.bf16.msra.mxu0 0
        %562 = vmatprep.subr.bf16.mxu0 0
        %563 = vmatpush1.bf16.msra.mxu0 0
        %564 = vmatprep.subr.bf16.mxu0 0
        %565 = vmatpush1.bf16.msra.mxu0 0
        %566 = vmatprep.subr.bf16.mxu0 0
        %567 = vmatpush1.bf16.msra.mxu0 0
        %568 = vmatprep.subr.bf16.mxu0 0
        %569 = vmatpush1.bf16.msra.mxu0 0
        %570 = vmatprep.subr.bf16.mxu0 0
        %571 = vmatpush1.bf16.msra.mxu0 0
        %572 = vmatprep.subr.bf16.mxu0 0
        %573 = vmatpush1.bf16.msra.mxu0 0
        %574 = vmatprep.subr.bf16.mxu0 0
        %575 = vmatpush1.bf16.msra.mxu0 0
        %576 = vmatprep.subr.bf16.mxu0 0
        %577 = vmatpush1.bf16.msra.mxu0 0
        %578 = vmatprep.subr.bf16.mxu0 0
        %579 = vmatpush1.bf16.msra.mxu0 0
        %580 = vmatprep.subr.bf16.mxu0 0
        %581 = vmatpush1.bf16.msra.mxu0 0
        %582 = vmatprep.mubr.bf16.mxu0 0
        %583 = vmatmul.mubr.bf16.gmra.mrb[0].mxu0 %v542
        %v584 = vpop.f32.mrb[0].mxu0
        %v585 = vadd.f32 0.0, %v584
        %v586 = vpop.f32.mrb[0].mxu0
        %v587 = vadd.f32 0.0, %v586
        %v588 = vpop.f32.mrb[0].mxu0
        %v589 = vpop.f32.mrb[0].mxu0
        %590 = vdwg.mxu0
        %v591 = vadd.f32 %v510, %v585
        %v592 = vadd.f32 %v511, %v587
        %v593 = vld [vmem:[%s202] sm:$0x3f]
        %s594 = scalar_lea.vmem %s1, 20
        %v595 = vld [vmem:[%s594] sm:$0xf]
        %v597 = vcombine.high %v593, %v593
        %v599 = vunpack.c.l.s4 1983009808
        %v600 = vunpack.c.0.s8 %v599
        %v601 = vlaneseq
        %v602 = vshrl.u32 %v601, 7
        %v603 = vsub.s32 %v600, %v602
        %v604 = vrot.slane %v593, %v603
        %v606 = vunpack.c.l.s4 1983009808
        %v607 = vunpack.c.0.s8 %v606
        %v608 = vlaneseq
        %v609 = vshrl.u32 %v608, 7
        %v610 = vsub.s32 %v607, %v609
        %v611 = vrot.slane %v597, %v610
        %v612 = vcombine.high %v604, %v604
        %613 = vrot.lane.b32.xlu0 %v604, 110
        %v614 = vpop.permute.xlu0 %613
        %615 = vrot.lane.b32.xlu0 %v612, 110
        %v616 = vpop.permute.xlu0 %615
        %617 = vrot.lane.b32.xlu0 %v611, 110
        %v618 = vpop.permute.xlu0 %617
        %vm619 = vcmask 900096
        %v620 = vsel %vm619, %v614, %v616
        %v621 = vsel %vm619, %v616, %v618
        %v623 = vsel %vm239, %v595, 0
        %v626 = vsel %vm243, %v620, 0
        %v629 = vsel %vm243, %v621, 0
        %631 = vmatprep.subr.bf16.mxu0 %v629
        %632 = vmatpush1.bf16.msra.mxu0 %v626
        %633 = vmatprep.subr.bf16.mxu0 0
        %634 = vmatpush1.bf16.msra.mxu0 0
        %635 = vmatprep.subr.bf16.mxu0 0
        %636 = vmatpush1.bf16.msra.mxu0 0
        %637 = vmatprep.subr.bf16.mxu0 0
        %638 = vmatpush1.bf16.msra.mxu0 0
        %639 = vmatprep.subr.bf16.mxu0 0
        %640 = vmatpush1.bf16.msra.mxu0 0
        %641 = vmatprep.subr.bf16.mxu0 0
        %642 = vmatpush1.bf16.msra.mxu0 0
        %643 = vmatprep.subr.bf16.mxu0 0
        %644 = vmatpush1.bf16.msra.mxu0 0
        %645 = vmatprep.subr.bf16.mxu0 0
        %646 = vmatpush1.bf16.msra.mxu0 0
        %647 = vmatprep.subr.bf16.mxu0 0
        %648 = vmatpush1.bf16.msra.mxu0 0
        %649 = vmatprep.subr.bf16.mxu0 0
        %650 = vmatpush1.bf16.msra.mxu0 0
        %651 = vmatprep.subr.bf16.mxu0 0
        %652 = vmatpush1.bf16.msra.mxu0 0
        %653 = vmatprep.subr.bf16.mxu0 0
        %654 = vmatpush1.bf16.msra.mxu0 0
        %655 = vmatprep.subr.bf16.mxu0 0
        %656 = vmatpush1.bf16.msra.mxu0 0
        %657 = vmatprep.subr.bf16.mxu0 0
        %658 = vmatpush1.bf16.msra.mxu0 0
        %659 = vmatprep.subr.bf16.mxu0 0
        %660 = vmatpush1.bf16.msra.mxu0 0
        %661 = vmatprep.subr.bf16.mxu0 0
        %662 = vmatpush1.bf16.msra.mxu0 0
        %663 = vmatprep.mubr.bf16.mxu0 0
        %664 = vmatmul.mubr.bf16.gmra.mrb[0].mxu0 %v623
        %v665 = vpop.f32.mrb[0].mxu0
        %v666 = vadd.f32 0.0, %v665
        %v667 = vpop.f32.mrb[0].mxu0
        %v668 = vadd.f32 0.0, %v667
        %v669 = vpop.f32.mrb[0].mxu0
        %v670 = vpop.f32.mrb[0].mxu0
        %671 = vdwg.mxu0
        %v672 = vadd.f32 %v591, %v666
        %v673 = vadd.f32 %v592, %v668
        %v674 = vld [vmem:[%s202] sm:$0x3f]
        %s675 = scalar_lea.vmem %s1, 24
        %v676 = vld [vmem:[%s675] sm:$0xf]
        %v678 = vcombine.high %v674, %v674
        %v680 = vunpack.c.l.s4 1983009808
        %v681 = vunpack.c.0.s8 %v680
        %v682 = vlaneseq
        %v683 = vshrl.u32 %v682, 7
        %v684 = vsub.s32 %v681, %v683
        %v685 = vrot.slane %v674, %v684
        %v687 = vunpack.c.l.s4 1983009808
        %v688 = vunpack.c.0.s8 %v687
        %v689 = vlaneseq
        %v690 = vshrl.u32 %v689, 7
        %v691 = vsub.s32 %v688, %v690
        %v692 = vrot.slane %v678, %v691
        %v693 = vcombine.high %v685, %v685
        %694 = vrot.lane.b32.xlu0 %v685, 96
        %v695 = vpop.permute.xlu0 %694
        %696 = vrot.lane.b32.xlu0 %v693, 96
        %v697 = vpop.permute.xlu0 %696
        %698 = vrot.lane.b32.xlu0 %v692, 96
        %v699 = vpop.permute.xlu0 %698
        %vm700 = vcmask 785408
        %v701 = vsel %vm700, %v695, %v697
        %v702 = vsel %vm700, %v697, %v699
        %v704 = vsel %vm239, %v676, 0
        %v707 = vsel %vm243, %v701, 0
        %v710 = vsel %vm243, %v702, 0
        %712 = vmatprep.subr.bf16.mxu0 %v710
        %713 = vmatpush1.bf16.msra.mxu0 %v707
        %714 = vmatprep.subr.bf16.mxu0 0
        %715 = vmatpush1.bf16.msra.mxu0 0
        %716 = vmatprep.subr.bf16.mxu0 0
        %717 = vmatpush1.bf16.msra.mxu0 0
        %718 = vmatprep.subr.bf16.mxu0 0
        %719 = vmatpush1.bf16.msra.mxu0 0
        %720 = vmatprep.subr.bf16.mxu0 0
        %721 = vmatpush1.bf16.msra.mxu0 0
        %722 = vmatprep.subr.bf16.mxu0 0
        %723 = vmatpush1.bf16.msra.mxu0 0
        %724 = vmatprep.subr.bf16.mxu0 0
        %725 = vmatpush1.bf16.msra.mxu0 0
        %726 = vmatprep.subr.bf16.mxu0 0
        %727 = vmatpush1.bf16.msra.mxu0 0
        %728 = vmatprep.subr.bf16.mxu0 0
        %729 = vmatpush1.bf16.msra.mxu0 0
        %730 = vmatprep.subr.bf16.mxu0 0
        %731 = vmatpush1.bf16.msra.mxu0 0
        %732 = vmatprep.subr.bf16.mxu0 0
        %733 = vmatpush1.bf16.msra.mxu0 0
        %734 = vmatprep.subr.bf16.mxu0 0
        %735 = vmatpush1.bf16.msra.mxu0 0
        %736 = vmatprep.subr.bf16.mxu0 0
        %737 = vmatpush1.bf16.msra.mxu0 0
        %738 = vmatprep.subr.bf16.mxu0 0
        %739 = vmatpush1.bf16.msra.mxu0 0
        %740 = vmatprep.subr.bf16.mxu0 0
        %741 = vmatpush1.bf16.msra.mxu0 0
        %742 = vmatprep.subr.bf16.mxu0 0
        %743 = vmatpush1.bf16.msra.mxu0 0
        %744 = vmatprep.mubr.bf16.mxu0 0
        %745 = vmatmul.mubr.bf16.gmra.mrb[0].mxu0 %v704
        %v746 = vpop.f32.mrb[0].mxu0
        %v747 = vadd.f32 0.0, %v746
        %v748 = vpop.f32.mrb[0].mxu0
        %v749 = vadd.f32 0.0, %v748
        %v750 = vpop.f32.mrb[0].mxu0
        %v751 = vpop.f32.mrb[0].mxu0
        %752 = vdwg.mxu0
        %v753 = vadd.f32 %v672, %v747
        %v754 = vadd.f32 %v673, %v749
        %v755 = vld [vmem:[%s202] sm:$0x3f]
        %s756 = scalar_lea.vmem %s1, 28
        %v757 = vld [vmem:[%s756] sm:$0xf]
        %v759 = vcombine.high %v755, %v755
        %v761 = vunpack.c.l.s4 1983009808
        %v762 = vunpack.c.0.s8 %v761
        %v763 = vlaneseq
        %v764 = vshrl.u32 %v763, 7
        %v765 = vsub.s32 %v762, %v764
        %v766 = vrot.slane %v755, %v765
        %v768 = vunpack.c.l.s4 1983009808
        %v769 = vunpack.c.0.s8 %v768
        %v770 = vlaneseq
        %v771 = vshrl.u32 %v770, 7
        %v772 = vsub.s32 %v769, %v771
        %v773 = vrot.slane %v759, %v772
        %v774 = vcombine.high %v766, %v766
        %775 = vrot.lane.b32.xlu0 %v766, 95
        %v776 = vpop.permute.xlu0 %775
        %777 = vrot.lane.b32.xlu0 %v774, 95
        %v778 = vpop.permute.xlu0 %777
        %779 = vrot.lane.b32.xlu0 %v773, 95
        %v780 = vpop.permute.xlu0 %779
        %vm781 = vcmask 777216
        %v782 = vsel %vm781, %v776, %v778
        %v783 = vsel %vm781, %v778, %v780
        %v785 = vsel %vm239, %v757, 0
        %v788 = vsel %vm243, %v782, 0
        %v791 = vsel %vm243, %v783, 0
        %793 = vmatprep.subr.bf16.mxu0 %v791
        %794 = vmatpush1.bf16.msra.mxu0 %v788
        %795 = vmatprep.subr.bf16.mxu0 0
        %796 = vmatpush1.bf16.msra.mxu0 0
        %797 = vmatprep.subr.bf16.mxu0 0
        %798 = vmatpush1.bf16.msra.mxu0 0
        %799 = vmatprep.subr.bf16.mxu0 0
        %800 = vmatpush1.bf16.msra.mxu0 0
        %801 = vmatprep.subr.bf16.mxu0 0
        %802 = vmatpush1.bf16.msra.mxu0 0
        %803 = vmatprep.subr.bf16.mxu0 0
        %804 = vmatpush1.bf16.msra.mxu0 0
        %805 = vmatprep.subr.bf16.mxu0 0
        %806 = vmatpush1.bf16.msra.mxu0 0
        %807 = vmatprep.subr.bf16.mxu0 0
        %808 = vmatpush1.bf16.msra.mxu0 0
        %809 = vmatprep.subr.bf16.mxu0 0
        %810 = vmatpush1.bf16.msra.mxu0 0
        %811 = vmatprep.subr.bf16.mxu0 0
        %812 = vmatpush1.bf16.msra.mxu0 0
        %813 = vmatprep.subr.bf16.mxu0 0
        %814 = vmatpush1.bf16.msra.mxu0 0
        %815 = vmatprep.subr.bf16.mxu0 0
        %816 = vmatpush1.bf16.msra.mxu0 0
        %817 = vmatprep.subr.bf16.mxu0 0
        %818 = vmatpush1.bf16.msra.mxu0 0
        %819 = vmatprep.subr.bf16.mxu0 0
        %820 = vmatpush1.bf16.msra.mxu0 0
        %821 = vmatprep.subr.bf16.mxu0 0
        %822 = vmatpush1.bf16.msra.mxu0 0
        %823 = vmatprep.subr.bf16.mxu0 0
        %824 = vmatpush1.bf16.msra.mxu0 0
        %825 = vmatprep.mubr.bf16.mxu0 0
        %826 = vmatmul.mubr.bf16.gmra.mrb[0].mxu0 %v785
        %v827 = vpop.f32.mrb[0].mxu0
        %v828 = vadd.f32 0.0, %v827
        %v829 = vpop.f32.mrb[0].mxu0
        %v830 = vadd.f32 0.0, %v829
        %v831 = vpop.f32.mrb[0].mxu0
        %v832 = vpop.f32.mrb[0].mxu0
        %833 = vdwg.mxu0
        %v834 = vadd.f32 %v753, %v828
        %v835 = vadd.f32 %v754, %v830
        %v836 = vld [vmem:[%s202] sm:$0x3f]
        %s837 = scalar_lea.vmem %s1, 32
        %v838 = vld [vmem:[%s837] sm:$0xf]
        %v840 = vcombine.high %v836, %v836
        %v842 = vunpack.c.l.s4 1983009808
        %v843 = vunpack.c.0.s8 %v842
        %v844 = vlaneseq
        %v845 = vshrl.u32 %v844, 7
        %v846 = vsub.s32 %v843, %v845
        %v847 = vrot.slane %v836, %v846
        %v849 = vunpack.c.l.s4 1983009808
        %v850 = vunpack.c.0.s8 %v849
        %v851 = vlaneseq
        %v852 = vshrl.u32 %v851, 7
        %v853 = vsub.s32 %v850, %v852
        %v854 = vrot.slane %v840, %v853
        %v855 = vcombine.high %v847, %v847
        %856 = vrot.lane.b32.xlu0 %v847, 94
        %v857 = vpop.permute.xlu0 %856
        %858 = vrot.lane.b32.xlu0 %v855, 94
        %v859 = vpop.permute.xlu0 %858
        %860 = vrot.lane.b32.xlu0 %v854, 94
        %v861 = vpop.permute.xlu0 %860
        %vm862 = vcmask 769024
        %v863 = vsel %vm862, %v857, %v859
        %v864 = vsel %vm862, %v859, %v861
        %v866 = vsel %vm239, %v838, 0
        %v869 = vsel %vm243, %v863, 0
        %v872 = vsel %vm243, %v864, 0
        %874 = vmatprep.subr.bf16.mxu0 %v872
        %875 = vmatpush1.bf16.msra.mxu0 %v869
        %876 = vmatprep.subr.bf16.mxu0 0
        %877 = vmatpush1.bf16.msra.mxu0 0
        %878 = vmatprep.subr.bf16.mxu0 0
        %879 = vmatpush1.bf16.msra.mxu0 0
        %880 = vmatprep.subr.bf16.mxu0 0
        %881 = vmatpush1.bf16.msra.mxu0 0
        %882 = vmatprep.subr.bf16.mxu0 0
        %883 = vmatpush1.bf16.msra.mxu0 0
        %884 = vmatprep.subr.bf16.mxu0 0
        %885 = vmatpush1.bf16.msra.mxu0 0
        %886 = vmatprep.subr.bf16.mxu0 0
        %887 = vmatpush1.bf16.msra.mxu0 0
        %888 = vmatprep.subr.bf16.mxu0 0
        %889 = vmatpush1.bf16.msra.mxu0 0
        %890 = vmatprep.subr.bf16.mxu0 0
        %891 = vmatpush1.bf16.msra.mxu0 0
        %892 = vmatprep.subr.bf16.mxu0 0
        %893 = vmatpush1.bf16.msra.mxu0 0
        %894 = vmatprep.subr.bf16.mxu0 0
        %895 = vmatpush1.bf16.msra.mxu0 0
        %896 = vmatprep.subr.bf16.mxu0 0
        %897 = vmatpush1.bf16.msra.mxu0 0
        %898 = vmatprep.subr.bf16.mxu0 0
        %899 = vmatpush1.bf16.msra.mxu0 0
        %900 = vmatprep.subr.bf16.mxu0 0
        %901 = vmatpush1.bf16.msra.mxu0 0
        %902 = vmatprep.subr.bf16.mxu0 0
        %903 = vmatpush1.bf16.msra.mxu0 0
        %904 = vmatprep.subr.bf16.mxu0 0
        %905 = vmatpush1.bf16.msra.mxu0 0
        %906 = vmatprep.mubr.bf16.mxu0 0
        %907 = vmatmul.mubr.bf16.gmra.mrb[0].mxu0 %v866
        %v908 = vpop.f32.mrb[0].mxu0
        %v909 = vadd.f32 0.0, %v908
        %v910 = vpop.f32.mrb[0].mxu0
        %v911 = vadd.f32 0.0, %v910
        %v912 = vpop.f32.mrb[0].mxu0
        %v913 = vpop.f32.mrb[0].mxu0
        %914 = vdwg.mxu0
        %v915 = vadd.f32 %v834, %v909
        %v916 = vadd.f32 %v835, %v911
        %917 = vst [vmem:[%s191] sm:$0xff] %v915
        %918 = vst [vmem:[%s191 + $0x8] sm:$0xff] %v916
        %v919 = vld [vmem:[%s2] sm:$0x3]
        %v921 = vlaneseq
        %v922 = vshrl.u32 %v921, 7
        %v923 = vsub.s32 0, %v922
        %v924 = vrot.slane %v919, %v923
        %v925 = vlaneseq
        %v926 = vshrl.u32 %v925, 7
        %v927 = vsub.s32 1, %v926
        %v928 = vrot.slane %v919, %v927
        %v931 = vmul.f32 %v915, %v924
        %v932 = vmul.f32 %v916, %v928
        %v933 = vadd.f32 %v931, %v932
        %934 = vadd.xlane.f32.xlu0 %v933
        %v935 = vpop.xlane.xlu0 %934
        %vm936 = vcmask 7168
        %937 = vst.msk [vmem:[%s206] sm:$0xff] %vm936, %v935
        %v938 = vmul.f32 %v931, %v915
        %v939 = vmul.f32 %v932, %v916
        %v940 = vadd.f32 %v938, %v939
        %941 = vadd.xlane.f32.xlu0 %v940
        %v942 = vpop.xlane.xlu0 %941
        %vm943 = vcmask 15368
        %944 = vst.msk [vmem:[%s206] sm:$0xff] %vm943, %v942
        %s945 = sand.u32 %s95, 1
        %s946 = scalar_lea.sflag [#allocation3], %s945
        %s947 = sand.u32 %s95, 1
        %s948 = smul.addr %s947, 16
        %s949 = scalar_lea.vmem [#allocation2], %s948
        %p950 = scmp.lt.s32.totalorder %s19, 1
        %s951 = scalar_select %p950, %s19, 1
        %s952 = smul.addr %s951, 8
        %s953 = scalar_lea.vmem %s4, %s952
        // Predicated region
        $region33: #{tpu_custom_call.1} parent=31 // pred_check
          %p954 = pneg %p105
        $region34: #{tpu_custom_call.1} parent=31 // pred_check_branch
          %956 = sbr.rel (%p954) target = $region36
        $region35: #{tpu_custom_call.1} parent=31 // pred_region
          %s958 = ssub.s32 256, 256
          %959 = vsyncadd %s946, %s958
          %s960 = smul.addr %s19, 2
          %s961 = smul.addr %s960, 128
          %s962 = scalar_lea.hbm %s3, %s961
          %s964 = sshll.u32 %s949, 4
          %s965 = int_to_ptr.vmem [resolvable:$true] %s964
          %967 = dma.vmem_to_hbm [thread:$0]  %s965, 256, %s962, %s946
        $region36: #{tpu_custom_call.1} parent=31 // pred_fallthru
          _
        // Predicated region
        $region37: #{tpu_custom_call.1} parent=31 // pred_check
          %p968 = pneg %p131
        $region38: #{tpu_custom_call.1} parent=31 // pred_check_branch
          %970 = sbr.rel (%p968) target = $region40
        $region39: #{tpu_custom_call.1} parent=31 // pred_region
          _
        $region40: #{tpu_custom_call.1} parent=31 // pred_fallthru
          _
      $region32: #{tpu_custom_call.1} parent=5 // pred_fallthru
        _
      %p971 = scmp.le.s32.totalorder 2, %s14
      // Predicated region
      $region41: #{tpu_custom_call.1} parent=5 // pred_check
        %p972 = pneg %p971
      $region42: #{tpu_custom_call.1} parent=5 // pred_check_branch
        %974 = sbr.rel (%p972) target = $region44
      $region43: #{tpu_custom_call.1} parent=5 // pred_region
        %s975 = ssub.s32 %s14, 2
        // Predicated region
        $region45: #{tpu_custom_call.1} parent=43 // pred_check
          %p976 = pneg %p111
        $region46: #{tpu_custom_call.1} parent=43 // pred_check_branch
          %978 = sbr.rel (%p976) target = $region48
        $region47: #{tpu_custom_call.1} parent=43 // pred_region
          %s979 = sand.u32 %s96, 1
          %s980 = scalar_lea.sflag [#allocation3], %s979
          %s981 = sand.u32 %s96, 1
          %s982 = smul.addr %s981, 16
          %s983 = scalar_lea.vmem [#allocation2], %s982
          %984 = dma.done %s980, 256
        $region48: #{tpu_custom_call.1} parent=43 // pred_fallthru
          _
        // Predicated region
        $region49: #{tpu_custom_call.1} parent=43 // pred_check
          %p985 = pneg %p137
        $region50: #{tpu_custom_call.1} parent=43 // pred_check_branch
          %987 = sbr.rel (%p985) target = $region52
        $region51: #{tpu_custom_call.1} parent=43 // pred_region
          %p988 = scmp.lt.s32.totalorder %s20, 1
          %s989 = scalar_select %p988, %s20, 1
          %s990 = smul.addr %s989, 8
          %s991 = scalar_lea.vmem %s4, %s990
        $region52: #{tpu_custom_call.1} parent=43 // pred_fallthru
          _
      $region44: #{tpu_custom_call.1} parent=5 // pred_fallthru
        _
    $region6: #{tpu_custom_call.1} parent=1 // loop_footer
      %s18 = sadd.s32 1, %s14
    $region7: #{tpu_custom_call.1} parent=1 // loop_footer_branch
      %13 = sbr.rel target = $region3
    $region8: #{tpu_custom_call.1} parent=1 // loop_exit
      _
    %992 = vsyncpa [#allocation3], 1
    %s993 = scalar_lea.sflag [#allocation3], 1
    %994 = vsyncpa %s993, 1

</llo_original>
